<compile_context>
chip_gen: v5e
topology: v5e:2x2
jax: 0.10.0
libtpu: 0.0.40
codegen_flags: <defaults>
</compile_context>

<pallas_src>
import functools

import jax
import jax.numpy as jnp
from jax.experimental import pallas as pl
from jax.experimental.pallas import tpu as pltpu


def _round_up(x, m):
    return (x + m - 1) // m * m


# ----------------------------- Pallas kernel ------------------------------ #
def _dfm_kernel(x_ref, we_ref, wh_ref, vec_ref, out_ref, *, D, H, E):
    OUTW = out_ref.shape[-1]
    bf16 = jnp.bfloat16

    x = x_ref[...]                          # (BM, 2D+1) = gt | noise | t
    gt = x[:, :D]
    noise = x[:, D:2 * D]
    t = x[:, 2 * D:2 * D + 1]               # (BM, 1)

    # mixed_input = t * gt + (1 - t) * noise
    mixed = t * gt + (1.0 - t) * noise      # (BM, D)

    # ---- vec unpack: 128-lane-aligned ref slices, hoisted once ----
    o = 0

    def take(n):
        nonlocal o
        v = vec_ref[:, o:o + n]
        o += n
        return v

    te1_w = take(E); te1_b = take(E); te2_b = take(E)
    ss_b = take(6 * H)
    fc1_rows = [take(H) for _ in range(D)]
    fc1_b = take(H); fc2_b = take(H); fc3_b = take(H)
    ln = [(take(H), take(H)) for _ in range(3)]
    head_b = take(OUTW)

    # ---- TimeEmbedding: Linear(1, E) is a rank-1 broadcast (VPU), then bf16 MXU ----
    h_t = jax.nn.silu(t * te1_w + te1_b)                                      # (BM, E)
    t_emb = jax.nn.silu(
        jnp.dot(h_t.astype(bf16), we_ref[:, :E],
                preferred_element_type=jnp.float32) + te2_b)                  # (BM, E)

    # ---- all three AdaLN scale/shift projections in one lane-dense bf16 matmul ----
    ss_all = jnp.dot(t_emb.astype(bf16), we_ref[:, E:E + 6 * H],
                     preferred_element_type=jnp.float32) + ss_b               # (BM, 6H)

    def ada_ln_silu(h, i):
        # one-pass LayerNorm over features (eps = 1e-5); activations are O(1) here
        m = jnp.mean(h, axis=-1, keepdims=True)
        m2 = jnp.mean(h * h, axis=-1, keepdims=True)
        var = m2 - m * m
        g, b = ln[i]
        hn = (h - m) * jax.lax.rsqrt(var + 1e-5) * g + b
        scale = ss_all[:, 2 * H * i:2 * H * i + H]
        shift = ss_all[:, 2 * H * i + H:2 * H * (i + 1)]
        return jax.nn.silu(hn * (1.0 + scale) + shift)

    # fc1 has K = D (= 2): broadcast FMAs on the VPU instead of a wasted MXU push.
    h = fc1_b
    for d in range(D):
        h = h + mixed[:, d:d + 1] * fc1_rows[d]
    h = ada_ln_silu(h, 0)
    h = ada_ln_silu(
        jnp.dot(h.astype(bf16), wh_ref[:, :H],
                preferred_element_type=jnp.float32) + fc2_b, 1)
    h = ada_ln_silu(
        jnp.dot(h.astype(bf16), wh_ref[:, H:2 * H],
                preferred_element_type=jnp.float32) + fc3_b, 2)

    # fused, lane-dense output heads: [pred_gt | pred_noise | 0-pad] -> unmasked store
    out_ref[...] = (jnp.dot(h.astype(bf16), wh_ref[:, 2 * H:],
                            preferred_element_type=jnp.float32) + head_b)


# ---------------------------- parameter packing ----------------------------- #
def pack_params(p, data_dim, hidden_dim, embed_dim):
    """Pack per-layer params into 3 kernel operands (done once, outside the hot path)."""
    D, H, E = data_dim, hidden_dim, embed_dim
    assert H % 128 == 0 and E % 128 == 0, "packing assumes 128-lane-aligned H and E"
    OUTW = max(128, _round_up(2 * D, 128))   # lane-dense padded head/output width

    # bf16 matmul slabs
    ss_w = jnp.concatenate([p["ss1_w"], p["ss2_w"], p["ss3_w"]], axis=1)      # (E, 6H)
    w_e = jnp.concatenate([p["te2_w"], ss_w], axis=1).astype(jnp.bfloat16)    # (E, E+6H)

    head_w = jnp.concatenate([p["gto_w"], p["no_w"]], axis=1)                 # (H, 2D)
    head_w = jnp.pad(head_w, ((0, 0), (0, OUTW - 2 * D)))                     # (H, OUTW)
    w_h = jnp.concatenate([p["fc2_w"], p["fc3_w"], head_w],
                          axis=1).astype(jnp.bfloat16)                        # (H, 2H+OUTW)

    # f32 vector slab: every bias / LN gamma-beta / te1 row / fc1 row, 128-aligned
    ss_b = jnp.concatenate([p["ss1_b"], p["ss2_b"], p["ss3_b"]], axis=1)      # (1, 6H)
    head_b = jnp.concatenate([p["gto_b"], p["no_b"]], axis=1)
    head_b = jnp.pad(head_b, ((0, 0), (0, OUTW - 2 * D)))                     # (1, OUTW)
    fc1_rows = [p["fc1_w"][d:d + 1, :] for d in range(D)]
    vec = jnp.concatenate(
        [p["te1_w"], p["te1_b"], p["te2_b"], ss_b]
        + fc1_rows
        + [p["fc1_b"], p["fc2_b"], p["fc3_b"],
           p["ln1_g"], p["ln1_b"], p["ln2_g"], p["ln2_b"], p["ln3_g"], p["ln3_b"],
           head_b],
        axis=1).astype(jnp.float32)                                           # (1, Vtot)

    return {"w_e": w_e, "w_h": w_h, "vec": vec, "dims": (D, H, E)}


# ------------------------------ JAX wrapper -------------------------------- #
def decoupled_flow_matching(packed, gt, noise, t, *, block_b=128):
    """Pallas forward. gt/noise: (B, D); t: (B,) or (B, 1). Returns (pred_gt, pred_noise)."""
    D, H, E = packed["dims"]
    OUTW = packed["w_h"].shape[1] - 2 * H
    B = gt.shape[0]

    t2 = jnp.reshape(t, (-1, 1)).astype(jnp.float32)                 # t.view(-1, 1)
    x = jnp.concatenate(
        [gt.astype(jnp.float32), noise.astype(jnp.float32), t2], axis=1)   # (B, 2D+1)

    # Pad batch to a multiple of the batch block (sublane-aligned); padded rows are
    # zeros (harmless) and sliced away below.
    bm = max(8, min(block_b, _round_up(B, 8)))
    Bp = _round_up(B, bm)
    if Bp != B:
        x = jnp.pad(x, ((0, Bp - B), (0, 0)))
    grid = (Bp // bm,)

    flops = 2 * Bp * (E * E + E * 6 * H + D * H + 2 * H * H + H * OUTW)
    bytes_accessed = (x.size * 4 + packed["w_e"].size * 2 + packed["w_h"].size * 2
                      + packed["vec"].size * 4 + Bp * OUTW * 4)

    out = pl.pallas_call(
        functools.partial(_dfm_kernel, D=D, H=H, E=E),
        out_shape=jax.ShapeDtypeStruct((Bp, OUTW), jnp.float32),
        grid_spec=pltpu.PrefetchScalarGridSpec(
            num_scalar_prefetch=0,
            grid=grid,
            in_specs=[
                pl.BlockSpec((bm, x.shape[1]), lambda i: (i, 0)),
                # constant index_maps: weights DMA'd once, VMEM-resident across blocks
                pl.BlockSpec(packed["w_e"].shape, lambda i: (0, 0)),
                pl.BlockSpec(packed["w_h"].shape, lambda i: (0, 0)),
                pl.BlockSpec(packed["vec"].shape, lambda i: (0, 0)),
            ],
            out_specs=pl.BlockSpec((bm, OUTW), lambda i: (i, 0)),
        ),
        compiler_params=pltpu.CompilerParams(
            dimension_semantics=("parallel",)),
        cost_estimate=pl.CostEstimate(
            flops=flops,
            transcendentals=Bp * (2 * E + 3 * H),
            bytes_accessed=bytes_accessed),
    )(x, packed["w_e"], packed["w_h"], packed["vec"])

    return out[:B, :D], out[:B, D:2 * D]


# --------------------------- parameter creation ----------------------------- #
def init_params(key, data_dim, hidden_dim, embed_dim):
    """Deterministic synthetic init. Linear weights stored pre-transposed as (in, out).

    NOTE: the PyTorch module zero-inits the AdaLN scale_shift layers; here we use small
    random values so that code path is actually exercised.
    """
    def uniform(k, shape, fan_in):
        bound = 1.0 / jnp.sqrt(jnp.float32(fan_in))
        return jax.random.uniform(k, shape, jnp.float32, -bound, bound)

    keys = iter(jax.random.split(key, 32))
    p = {}
    # TimeEmbedding
    p["te1_w"] = uniform(next(keys), (1, embed_dim), 1)
    p["te1_b"] = uniform(next(keys), (1, embed_dim), 1)
    p["te2_w"] = uniform(next(keys), (embed_dim, embed_dim), embed_dim)
    p["te2_b"] = uniform(next(keys), (1, embed_dim), embed_dim)
    # Trunk layers
    in_dims = [data_dim, hidden_dim, hidden_dim]
    for i in (1, 2, 3):
        fan = in_dims[i - 1]
        p[f"fc{i}_w"] = uniform(next(keys), (fan, hidden_dim), fan)
        p[f"fc{i}_b"] = uniform(next(keys), (1, hidden_dim), fan)
        p[f"ln{i}_g"] = jnp.ones((1, hidden_dim), jnp.float32)
        p[f"ln{i}_b"] = jnp.zeros((1, hidden_dim), jnp.float32)
        p[f"ss{i}_w"] = 0.1 * uniform(next(keys), (embed_dim, 2 * hidden_dim), embed_dim)
        p[f"ss{i}_b"] = 0.1 * uniform(next(keys), (1, 2 * hidden_dim), embed_dim)
    # Output heads
    p["gto_w"] = uniform(next(keys), (hidden_dim, data_dim), hidden_dim)
    p["gto_b"] = uniform(next(keys), (1, data_dim), hidden_dim)
    p["no_w"] = uniform(next(keys), (hidden_dim, data_dim), hidden_dim)
    p["no_b"] = uniform(next(keys), (1, data_dim), hidden_dim)
    return p


# ------------------------- pure-JAX reference check ------------------------- #
def reference_forward(p, gt, noise, t):
    """Matches the kernel's numerics: bf16 matmul operands with f32 accumulation,
    VPU-style fc1 FMAs, one-pass LayerNorm (mathematically identical to nn.LayerNorm)."""
    bf16 = jnp.bfloat16

    def bdot(a, w):
        return jnp.dot(a.astype(bf16), w.astype(bf16),
                       preferred_element_type=jnp.float32)

    t = jnp.reshape(t, (-1, 1)).astype(jnp.float32)
    mixed = t * gt + (1.0 - t) * noise
    h_t = jax.nn.silu(t * p["te1_w"] + p["te1_b"])
    t_emb = jax.nn.silu(bdot(h_t, p["te2_w"]) + p["te2_b"])

    def ada_ln_silu(h, i):
        m = jnp.mean(h, axis=-1, keepdims=True)
        m2 = jnp.mean(h * h, axis=-1, keepdims=True)
        var = m2 - m * m
        hn = (h - m) * jax.lax.rsqrt(var + 1e-5) * p[f"ln{i}_g"] + p[f"ln{i}_b"]
        ss = bdot(t_emb, p[f"ss{i}_w"]) + p[f"ss{i}_b"]
        hd = hn.shape[-1]
        return jax.nn.silu(hn * (1.0 + ss[:, :hd]) + ss[:, hd:])

    h = p["fc1_b"]
    for d in range(mixed.shape[-1]):
        h = h + mixed[:, d:d + 1] * p["fc1_w"][d:d + 1, :]
    h = ada_ln_silu(h, 1)
    h = ada_ln_silu(bdot(h, p["fc2_w"]) + p["fc2_b"], 2)
    h = ada_ln_silu(bdot(h, p["fc3_w"]) + p["fc3_b"], 3)
    return bdot(h, p["gto_w"]) + p["gto_b"], bdot(h, p["no_w"]) + p["no_b"]


if __name__ == "__main__":
    # Module defaults: data_dim=2, hidden_dim=128, embed_dim=128 (lane-dense on TPU).
    DATA_DIM, HIDDEN_DIM, EMBED_DIM, BATCH = 2, 128, 128, 8

    key = jax.random.PRNGKey(0)
    k_p, k_gt, k_n, k_t = jax.random.split(key, 4)
    params = init_params(k_p, DATA_DIM, HIDDEN_DIM, EMBED_DIM)
    packed = pack_params(params, DATA_DIM, HIDDEN_DIM, EMBED_DIM)  # packed once

    gt = jax.random.normal(k_gt, (BATCH, DATA_DIM), jnp.float32)
    noise = jax.random.normal(k_n, (BATCH, DATA_DIM), jnp.float32)
    t = jax.random.uniform(k_t, (BATCH,), jnp.float32)

    fwd = jax.jit(functools.partial(decoupled_flow_matching, packed))
    pred_gt, pred_noise = fwd(gt, noise, t)
    jax.block_until_ready((pred_gt, pred_noise))

    ref_gt, ref_noise = reference_forward(params, gt, noise, t)
    assert bool(jnp.allclose(pred_gt, ref_gt, atol=1e-2, rtol=1e-2))
    assert bool(jnp.allclose(pred_noise, ref_noise, atol=1e-2, rtol=1e-2))

    # Exercise the multi-block grid path (weights stay VMEM-resident across batch
    # blocks; batch axis is "parallel" so it shards across v7x's 2 TensorCores).
    B2 = 300
    gt2 = jax.random.normal(jax.random.PRNGKey(1), (B2, DATA_DIM), jnp.float32)
    noise2 = jax.random.normal(jax.random.PRNGKey(2), (B2, DATA_DIM), jnp.float32)
    t2 = jax.random.uniform(jax.random.PRNGKey(3), (B2,), jnp.float32)
    pg2, pn2 = fwd(gt2, noise2, t2)
    jax.block_until_ready((pg2, pn2))
    rg2, rn2 = reference_forward(params, gt2, noise2, t2)
    assert bool(jnp.allclose(pg2, rg2, atol=1e-2, rtol=1e-2))
    assert bool(jnp.allclose(pn2, rn2, atol=1e-2, rtol=1e-2))

    print("KERNEL_OK")
</pallas_src>

<mosaic_0001>
module attributes {stable_mosaic.version = 11 : i64} {
  func.func @_dfm_kernel(%arg0: i32, %arg1: memref<8x5xf32, #tpu.memory_space<vmem>>, %arg2: memref<128x896xbf16, #tpu.memory_space<vmem>>, %arg3: memref<128x384xbf16, #tpu.memory_space<vmem>>, %arg4: memref<1x2688xf32, #tpu.memory_space<vmem>>, %arg5: memref<8x128xf32, #tpu.memory_space<vmem>>) attributes {dimension_semantics = [#tpu.dimension_semantics<parallel>], iteration_bounds = array<i64: 1>, scalar_prefetch = 0 : i64, scratch_operands = 0 : i64, tpu.core_type = #tpu.core_type<tc>, window_params = [{transform_indices = @transform_0, window_bounds = array<i64: 8, 5>}, {pipeline_mode = #tpu.pipeline_mode<synchronous>, transform_indices = @transform_1, window_bounds = array<i64: 128, 896>}, {pipeline_mode = #tpu.pipeline_mode<synchronous>, transform_indices = @transform_2, window_bounds = array<i64: 128, 384>}, {pipeline_mode = #tpu.pipeline_mode<synchronous>, transform_indices = @transform_3, window_bounds = array<i64: 1, 2688>}, {transform_indices = @transform_4, window_bounds = array<i64: 8, 128>}]} {
    %c0 = arith.constant 0 : index
    %c0_0 = arith.constant 0 : index
    %0 = vector.load %arg1[%c0, %c0_0] : memref<8x5xf32, #tpu.memory_space<vmem>>, vector<8x5xf32>
    %1 = vector.extract_strided_slice %0 {offsets = [0, 0], sizes = [8, 2], strides = [1, 1]} : vector<8x5xf32> to vector<8x2xf32>
    %2 = vector.extract_strided_slice %0 {offsets = [0, 2], sizes = [8, 2], strides = [1, 1]} : vector<8x5xf32> to vector<8x2xf32>
    %3 = vector.extract_strided_slice %0 {offsets = [0, 4], sizes = [8, 1], strides = [1, 1]} : vector<8x5xf32> to vector<8x1xf32>
    %4 = vector.broadcast %3 : vector<8x1xf32> to vector<8x2xf32>
    %5 = arith.mulf %4, %1 : vector<8x2xf32>
    %cst = arith.constant 1.000000e+00 : f32
    %6 = vector.broadcast %cst : f32 to vector<8x1xf32>
    %7 = arith.subf %6, %3 : vector<8x1xf32>
    %8 = vector.broadcast %7 : vector<8x1xf32> to vector<8x2xf32>
    %9 = arith.mulf %8, %2 : vector<8x2xf32>
    %10 = arith.addf %5, %9 : vector<8x2xf32>
    %c0_1 = arith.constant 0 : index
    %c0_2 = arith.constant 0 : index
    %11 = vector.load %arg4[%c0_1, %c0_2] : memref<1x2688xf32, #tpu.memory_space<vmem>>, vector<1x128xf32>
    %c0_3 = arith.constant 0 : index
    %c128 = arith.constant 128 : index
    %12 = vector.load %arg4[%c0_3, %c128] : memref<1x2688xf32, #tpu.memory_space<vmem>>, vector<1x128xf32>
    %c0_4 = arith.constant 0 : index
    %c256 = arith.constant 256 : index
    %13 = vector.load %arg4[%c0_4, %c256] : memref<1x2688xf32, #tpu.memory_space<vmem>>, vector<1x128xf32>
    %c0_5 = arith.constant 0 : index
    %c384 = arith.constant 384 : index
    %14 = vector.load %arg4[%c0_5, %c384] : memref<1x2688xf32, #tpu.memory_space<vmem>>, vector<1x768xf32>
    %c0_6 = arith.constant 0 : index
    %c1152 = arith.constant 1152 : index
    %15 = vector.load %arg4[%c0_6, %c1152] : memref<1x2688xf32, #tpu.memory_space<vmem>>, vector<1x128xf32>
    %c0_7 = arith.constant 0 : index
    %c1280 = arith.constant 1280 : index
    %16 = vector.load %arg4[%c0_7, %c1280] : memref<1x2688xf32, #tpu.memory_space<vmem>>, vector<1x128xf32>
    %c0_8 = arith.constant 0 : index
    %c1408 = arith.constant 1408 : index
    %17 = vector.load %arg4[%c0_8, %c1408] : memref<1x2688xf32, #tpu.memory_space<vmem>>, vector<1x128xf32>
    %c0_9 = arith.constant 0 : index
    %c1536 = arith.constant 1536 : index
    %18 = vector.load %arg4[%c0_9, %c1536] : memref<1x2688xf32, #tpu.memory_space<vmem>>, vector<1x128xf32>
    %c0_10 = arith.constant 0 : index
    %c1664 = arith.constant 1664 : index
    %19 = vector.load %arg4[%c0_10, %c1664] : memref<1x2688xf32, #tpu.memory_space<vmem>>, vector<1x128xf32>
    %c0_11 = arith.constant 0 : index
    %c1792 = arith.constant 1792 : index
    %20 = vector.load %arg4[%c0_11, %c1792] : memref<1x2688xf32, #tpu.memory_space<vmem>>, vector<1x128xf32>
    %c0_12 = arith.constant 0 : index
    %c1920 = arith.constant 1920 : index
    %21 = vector.load %arg4[%c0_12, %c1920] : memref<1x2688xf32, #tpu.memory_space<vmem>>, vector<1x128xf32>
    %c0_13 = arith.constant 0 : index
    %c2048 = arith.constant 2048 : index
    %22 = vector.load %arg4[%c0_13, %c2048] : memref<1x2688xf32, #tpu.memory_space<vmem>>, vector<1x128xf32>
    %c0_14 = arith.constant 0 : index
    %c2176 = arith.constant 2176 : index
    %23 = vector.load %arg4[%c0_14, %c2176] : memref<1x2688xf32, #tpu.memory_space<vmem>>, vector<1x128xf32>
    %c0_15 = arith.constant 0 : index
    %c2304 = arith.constant 2304 : index
    %24 = vector.load %arg4[%c0_15, %c2304] : memref<1x2688xf32, #tpu.memory_space<vmem>>, vector<1x128xf32>
    %c0_16 = arith.constant 0 : index
    %c2432 = arith.constant 2432 : index
    %25 = vector.load %arg4[%c0_16, %c2432] : memref<1x2688xf32, #tpu.memory_space<vmem>>, vector<1x128xf32>
    %c0_17 = arith.constant 0 : index
    %c2560 = arith.constant 2560 : index
    %26 = vector.load %arg4[%c0_17, %c2560] : memref<1x2688xf32, #tpu.memory_space<vmem>>, vector<1x128xf32>
    %27 = vector.broadcast %3 : vector<8x1xf32> to vector<8x128xf32>
    %28 = vector.broadcast %11 : vector<1x128xf32> to vector<8x128xf32>
    %29 = arith.mulf %27, %28 : vector<8x128xf32>
    %30 = vector.broadcast %12 : vector<1x128xf32> to vector<8x128xf32>
    %31 = arith.addf %29, %30 : vector<8x128xf32>
    %32 = arith.negf %31 : vector<8x128xf32>
    %33 = math.exp %32 : vector<8x128xf32>
    %cst_18 = arith.constant 1.000000e+00 : f32
    %34 = vector.broadcast %cst_18 : f32 to vector<8x128xf32>
    %35 = arith.addf %34, %33 : vector<8x128xf32>
    %36 = arith.divf %34, %35 : vector<8x128xf32>
    %37 = arith.mulf %31, %36 : vector<8x128xf32>
    %38 = arith.truncf %37 : vector<8x128xf32> to vector<8x128xbf16>
    %c0_19 = arith.constant 0 : index
    %c0_20 = arith.constant 0 : index
    %39 = vector.load %arg2[%c0_19, %c0_20] : memref<128x896xbf16, #tpu.memory_space<vmem>>, vector<128x128xbf16>
    %cst_21 = arith.constant dense<0.000000e+00> : vector<8x128xf32>
    %40 = tpu.matmul %38, %39, %cst_21 {dimension_numbers = #tpu.dot_dimension_numbers<[1], [0], [0], [1], [0, 0, 1, 1], [], []>} : vector<8x128xbf16>, vector<128x128xbf16>, vector<8x128xf32> -> vector<8x128xf32>
    %41 = vector.broadcast %13 : vector<1x128xf32> to vector<8x128xf32>
    %42 = arith.addf %40, %41 : vector<8x128xf32>
    %43 = arith.negf %42 : vector<8x128xf32>
    %44 = math.exp %43 : vector<8x128xf32>
    %cst_22 = arith.constant 1.000000e+00 : f32
    %45 = vector.broadcast %cst_22 : f32 to vector<8x128xf32>
    %46 = arith.addf %45, %44 : vector<8x128xf32>
    %47 = arith.divf %45, %46 : vector<8x128xf32>
    %48 = arith.mulf %42, %47 : vector<8x128xf32>
    %49 = arith.truncf %48 : vector<8x128xf32> to vector<8x128xbf16>
    %c0_23 = arith.constant 0 : index
    %c128_24 = arith.constant 128 : index
    %50 = vector.load %arg2[%c0_23, %c128_24] : memref<128x896xbf16, #tpu.memory_space<vmem>>, vector<128x768xbf16>
    %cst_25 = arith.constant dense<0.000000e+00> : vector<8x768xf32>
    %51 = tpu.matmul %49, %50, %cst_25 {dimension_numbers = #tpu.dot_dimension_numbers<[1], [0], [0], [1], [0, 0, 1, 1], [], []>} : vector<8x128xbf16>, vector<128x768xbf16>, vector<8x768xf32> -> vector<8x768xf32>
    %52 = vector.broadcast %14 : vector<1x768xf32> to vector<8x768xf32>
    %53 = arith.addf %51, %52 : vector<8x768xf32>
    %54 = vector.extract_strided_slice %10 {offsets = [0, 0], sizes = [8, 1], strides = [1, 1]} : vector<8x2xf32> to vector<8x1xf32>
    %55 = vector.broadcast %54 : vector<8x1xf32> to vector<8x128xf32>
    %56 = vector.broadcast %15 : vector<1x128xf32> to vector<8x128xf32>
    %57 = arith.mulf %55, %56 : vector<8x128xf32>
    %58 = vector.broadcast %17 : vector<1x128xf32> to vector<8x128xf32>
    %59 = arith.addf %58, %57 : vector<8x128xf32>
    %60 = vector.extract_strided_slice %10 {offsets = [0, 1], sizes = [8, 1], strides = [1, 1]} : vector<8x2xf32> to vector<8x1xf32>
    %61 = vector.broadcast %60 : vector<8x1xf32> to vector<8x128xf32>
    %62 = vector.broadcast %16 : vector<1x128xf32> to vector<8x128xf32>
    %63 = arith.mulf %61, %62 : vector<8x128xf32>
    %64 = arith.addf %59, %63 : vector<8x128xf32>
    %cst_26 = arith.constant dense<0.000000e+00> : vector<8xf32>
    %65 = vector.multi_reduction <add>, %64, %cst_26 [1] : vector<8x128xf32> to vector<8xf32>
    %66 = vector.shape_cast %65 : vector<8xf32> to vector<8x1xf32>
    %cst_27 = arith.constant 1.280000e+02 : f32
    %67 = vector.broadcast %cst_27 : f32 to vector<8x1xf32>
    %68 = arith.divf %66, %67 : vector<8x1xf32>
    %69 = arith.mulf %64, %64 : vector<8x128xf32>
    %cst_28 = arith.constant dense<0.000000e+00> : vector<8xf32>
    %70 = vector.multi_reduction <add>, %69, %cst_28 [1] : vector<8x128xf32> to vector<8xf32>
    %71 = vector.shape_cast %70 : vector<8xf32> to vector<8x1xf32>
    %cst_29 = arith.constant 1.280000e+02 : f32
    %72 = vector.broadcast %cst_29 : f32 to vector<8x1xf32>
    %73 = arith.divf %71, %72 : vector<8x1xf32>
    %74 = arith.mulf %68, %68 : vector<8x1xf32>
    %75 = arith.subf %73, %74 : vector<8x1xf32>
    %76 = vector.broadcast %68 : vector<8x1xf32> to vector<8x128xf32>
    %77 = arith.subf %64, %76 : vector<8x128xf32>
    %cst_30 = arith.constant 9.99999974E-6 : f32
    %78 = vector.broadcast %cst_30 : f32 to vector<8x1xf32>
    %79 = arith.addf %75, %78 : vector<8x1xf32>
    %80 = math.rsqrt %79 : vector<8x1xf32>
    %81 = vector.broadcast %80 : vector<8x1xf32> to vector<8x128xf32>
    %82 = arith.mulf %77, %81 : vector<8x128xf32>
    %83 = vector.broadcast %20 : vector<1x128xf32> to vector<8x128xf32>
    %84 = arith.mulf %82, %83 : vector<8x128xf32>
    %85 = vector.broadcast %21 : vector<1x128xf32> to vector<8x128xf32>
    %86 = arith.addf %84, %85 : vector<8x128xf32>
    %87 = vector.extract_strided_slice %53 {offsets = [0, 0], sizes = [8, 128], strides = [1, 1]} : vector<8x768xf32> to vector<8x128xf32>
    %88 = vector.extract_strided_slice %53 {offsets = [0, 128], sizes = [8, 128], strides = [1, 1]} : vector<8x768xf32> to vector<8x128xf32>
    %cst_31 = arith.constant 1.000000e+00 : f32
    %89 = vector.broadcast %cst_31 : f32 to vector<8x128xf32>
    %90 = arith.addf %89, %87 : vector<8x128xf32>
    %91 = arith.mulf %86, %90 : vector<8x128xf32>
    %92 = arith.addf %91, %88 : vector<8x128xf32>
    %93 = arith.negf %92 : vector<8x128xf32>
    %94 = math.exp %93 : vector<8x128xf32>
    %cst_32 = arith.constant 1.000000e+00 : f32
    %95 = vector.broadcast %cst_32 : f32 to vector<8x128xf32>
    %96 = arith.addf %95, %94 : vector<8x128xf32>
    %97 = arith.divf %95, %96 : vector<8x128xf32>
    %98 = arith.mulf %92, %97 : vector<8x128xf32>
    %99 = arith.truncf %98 : vector<8x128xf32> to vector<8x128xbf16>
    %c0_33 = arith.constant 0 : index
    %c0_34 = arith.constant 0 : index
    %100 = vector.load %arg3[%c0_33, %c0_34] : memref<128x384xbf16, #tpu.memory_space<vmem>>, vector<128x128xbf16>
    %cst_35 = arith.constant dense<0.000000e+00> : vector<8x128xf32>
    %101 = tpu.matmul %99, %100, %cst_35 {dimension_numbers = #tpu.dot_dimension_numbers<[1], [0], [0], [1], [0, 0, 1, 1], [], []>} : vector<8x128xbf16>, vector<128x128xbf16>, vector<8x128xf32> -> vector<8x128xf32>
    %102 = vector.broadcast %18 : vector<1x128xf32> to vector<8x128xf32>
    %103 = arith.addf %101, %102 : vector<8x128xf32>
    %cst_36 = arith.constant dense<0.000000e+00> : vector<8xf32>
    %104 = vector.multi_reduction <add>, %103, %cst_36 [1] : vector<8x128xf32> to vector<8xf32>
    %105 = vector.shape_cast %104 : vector<8xf32> to vector<8x1xf32>
    %cst_37 = arith.constant 1.280000e+02 : f32
    %106 = vector.broadcast %cst_37 : f32 to vector<8x1xf32>
    %107 = arith.divf %105, %106 : vector<8x1xf32>
    %108 = arith.mulf %103, %103 : vector<8x128xf32>
    %cst_38 = arith.constant dense<0.000000e+00> : vector<8xf32>
    %109 = vector.multi_reduction <add>, %108, %cst_38 [1] : vector<8x128xf32> to vector<8xf32>
    %110 = vector.shape_cast %109 : vector<8xf32> to vector<8x1xf32>
    %cst_39 = arith.constant 1.280000e+02 : f32
    %111 = vector.broadcast %cst_39 : f32 to vector<8x1xf32>
    %112 = arith.divf %110, %111 : vector<8x1xf32>
    %113 = arith.mulf %107, %107 : vector<8x1xf32>
    %114 = arith.subf %112, %113 : vector<8x1xf32>
    %115 = vector.broadcast %107 : vector<8x1xf32> to vector<8x128xf32>
    %116 = arith.subf %103, %115 : vector<8x128xf32>
    %cst_40 = arith.constant 9.99999974E-6 : f32
    %117 = vector.broadcast %cst_40 : f32 to vector<8x1xf32>
    %118 = arith.addf %114, %117 : vector<8x1xf32>
    %119 = math.rsqrt %118 : vector<8x1xf32>
    %120 = vector.broadcast %119 : vector<8x1xf32> to vector<8x128xf32>
    %121 = arith.mulf %116, %120 : vector<8x128xf32>
    %122 = vector.broadcast %22 : vector<1x128xf32> to vector<8x128xf32>
    %123 = arith.mulf %121, %122 : vector<8x128xf32>
    %124 = vector.broadcast %23 : vector<1x128xf32> to vector<8x128xf32>
    %125 = arith.addf %123, %124 : vector<8x128xf32>
    %126 = vector.extract_strided_slice %53 {offsets = [0, 256], sizes = [8, 128], strides = [1, 1]} : vector<8x768xf32> to vector<8x128xf32>
    %127 = vector.extract_strided_slice %53 {offsets = [0, 384], sizes = [8, 128], strides = [1, 1]} : vector<8x768xf32> to vector<8x128xf32>
    %cst_41 = arith.constant 1.000000e+00 : f32
    %128 = vector.broadcast %cst_41 : f32 to vector<8x128xf32>
    %129 = arith.addf %128, %126 : vector<8x128xf32>
    %130 = arith.mulf %125, %129 : vector<8x128xf32>
    %131 = arith.addf %130, %127 : vector<8x128xf32>
    %132 = arith.negf %131 : vector<8x128xf32>
    %133 = math.exp %132 : vector<8x128xf32>
    %cst_42 = arith.constant 1.000000e+00 : f32
    %134 = vector.broadcast %cst_42 : f32 to vector<8x128xf32>
    %135 = arith.addf %134, %133 : vector<8x128xf32>
    %136 = arith.divf %134, %135 : vector<8x128xf32>
    %137 = arith.mulf %131, %136 : vector<8x128xf32>
    %138 = arith.truncf %137 : vector<8x128xf32> to vector<8x128xbf16>
    %c0_43 = arith.constant 0 : index
    %c128_44 = arith.constant 128 : index
    %139 = vector.load %arg3[%c0_43, %c128_44] : memref<128x384xbf16, #tpu.memory_space<vmem>>, vector<128x128xbf16>
    %cst_45 = arith.constant dense<0.000000e+00> : vector<8x128xf32>
    %140 = tpu.matmul %138, %139, %cst_45 {dimension_numbers = #tpu.dot_dimension_numbers<[1], [0], [0], [1], [0, 0, 1, 1], [], []>} : vector<8x128xbf16>, vector<128x128xbf16>, vector<8x128xf32> -> vector<8x128xf32>
    %141 = vector.broadcast %19 : vector<1x128xf32> to vector<8x128xf32>
    %142 = arith.addf %140, %141 : vector<8x128xf32>
    %cst_46 = arith.constant dense<0.000000e+00> : vector<8xf32>
    %143 = vector.multi_reduction <add>, %142, %cst_46 [1] : vector<8x128xf32> to vector<8xf32>
    %144 = vector.shape_cast %143 : vector<8xf32> to vector<8x1xf32>
    %cst_47 = arith.constant 1.280000e+02 : f32
    %145 = vector.broadcast %cst_47 : f32 to vector<8x1xf32>
    %146 = arith.divf %144, %145 : vector<8x1xf32>
    %147 = arith.mulf %142, %142 : vector<8x128xf32>
    %cst_48 = arith.constant dense<0.000000e+00> : vector<8xf32>
    %148 = vector.multi_reduction <add>, %147, %cst_48 [1] : vector<8x128xf32> to vector<8xf32>
    %149 = vector.shape_cast %148 : vector<8xf32> to vector<8x1xf32>
    %cst_49 = arith.constant 1.280000e+02 : f32
    %150 = vector.broadcast %cst_49 : f32 to vector<8x1xf32>
    %151 = arith.divf %149, %150 : vector<8x1xf32>
    %152 = arith.mulf %146, %146 : vector<8x1xf32>
    %153 = arith.subf %151, %152 : vector<8x1xf32>
    %154 = vector.broadcast %146 : vector<8x1xf32> to vector<8x128xf32>
    %155 = arith.subf %142, %154 : vector<8x128xf32>
    %cst_50 = arith.constant 9.99999974E-6 : f32
    %156 = vector.broadcast %cst_50 : f32 to vector<8x1xf32>
    %157 = arith.addf %153, %156 : vector<8x1xf32>
    %158 = math.rsqrt %157 : vector<8x1xf32>
    %159 = vector.broadcast %158 : vector<8x1xf32> to vector<8x128xf32>
    %160 = arith.mulf %155, %159 : vector<8x128xf32>
    %161 = vector.broadcast %24 : vector<1x128xf32> to vector<8x128xf32>
    %162 = arith.mulf %160, %161 : vector<8x128xf32>
    %163 = vector.broadcast %25 : vector<1x128xf32> to vector<8x128xf32>
    %164 = arith.addf %162, %163 : vector<8x128xf32>
    %165 = vector.extract_strided_slice %53 {offsets = [0, 512], sizes = [8, 128], strides = [1, 1]} : vector<8x768xf32> to vector<8x128xf32>
    %166 = vector.extract_strided_slice %53 {offsets = [0, 640], sizes = [8, 128], strides = [1, 1]} : vector<8x768xf32> to vector<8x128xf32>
    %cst_51 = arith.constant 1.000000e+00 : f32
    %167 = vector.broadcast %cst_51 : f32 to vector<8x128xf32>
    %168 = arith.addf %167, %165 : vector<8x128xf32>
    %169 = arith.mulf %164, %168 : vector<8x128xf32>
    %170 = arith.addf %169, %166 : vector<8x128xf32>
    %171 = arith.negf %170 : vector<8x128xf32>
    %172 = math.exp %171 : vector<8x128xf32>
    %cst_52 = arith.constant 1.000000e+00 : f32
    %173 = vector.broadcast %cst_52 : f32 to vector<8x128xf32>
    %174 = arith.addf %173, %172 : vector<8x128xf32>
    %175 = arith.divf %173, %174 : vector<8x128xf32>
    %176 = arith.mulf %170, %175 : vector<8x128xf32>
    %177 = arith.truncf %176 : vector<8x128xf32> to vector<8x128xbf16>
    %c0_53 = arith.constant 0 : index
    %c256_54 = arith.constant 256 : index
    %178 = vector.load %arg3[%c0_53, %c256_54] : memref<128x384xbf16, #tpu.memory_space<vmem>>, vector<128x128xbf16>
    %cst_55 = arith.constant dense<0.000000e+00> : vector<8x128xf32>
    %179 = tpu.matmul %177, %178, %cst_55 {dimension_numbers = #tpu.dot_dimension_numbers<[1], [0], [0], [1], [0, 0, 1, 1], [], []>} : vector<8x128xbf16>, vector<128x128xbf16>, vector<8x128xf32> -> vector<8x128xf32>
    %180 = vector.broadcast %26 : vector<1x128xf32> to vector<8x128xf32>
    %181 = arith.addf %179, %180 : vector<8x128xf32>
    %c0_56 = arith.constant 0 : index
    %c0_57 = arith.constant 0 : index
    %182 = vector.load %arg5[%c0_56, %c0_57] : memref<8x128xf32, #tpu.memory_space<vmem>>, vector<8x128xf32>
    tpu.vector_store %arg5[%c0_56, %c0_57], %181 {strides = array<i32>} : memref<8x128xf32, #tpu.memory_space<vmem>>, vector<8x128xf32>,
    return
  }
  func.func @transform_0(%arg0: i32) -> (i32, i32) {
    %c0_i32 = arith.constant 0 : i32
    %c0_i32_0 = arith.constant 0 : i32
    return %arg0, %c0_i32 : i32, i32
  }
  func.func @transform_1(%arg0: i32) -> (i32, i32) {
    %c0_i32 = arith.constant 0 : i32
    %c0_i32_0 = arith.constant 0 : i32
    %c0_i32_1 = arith.constant 0 : i32
    return %c0_i32, %c0_i32_0 : i32, i32
  }
  func.func @transform_2(%arg0: i32) -> (i32, i32) {
    %c0_i32 = arith.constant 0 : i32
    %c0_i32_0 = arith.constant 0 : i32
    %c0_i32_1 = arith.constant 0 : i32
    return %c0_i32, %c0_i32_0 : i32, i32
  }
  func.func @transform_3(%arg0: i32) -> (i32, i32) {
    %c0_i32 = arith.constant 0 : i32
    %c0_i32_0 = arith.constant 0 : i32
    %c0_i32_1 = arith.constant 0 : i32
    return %c0_i32, %c0_i32_0 : i32, i32
  }
  func.func @transform_4(%arg0: i32) -> (i32, i32) {
    %c0_i32 = arith.constant 0 : i32
    %c0_i32_0 = arith.constant 0 : i32
    return %arg0, %c0_i32 : i32, i32
  }
}

</mosaic_0001>

<llo_original>
// kernel: decoupled_flow_matching.1
$region0: #{decoupled_flow_matching.1}
  #allocation0 [shape = 'u32[]', space=smem, size = 0x4, offset = 0x4, fixed_abs, tag = 'smem constant byte address 0x4 - core index']
  #allocation1 [shape = 'u32[72,128]{1,0:T(1,128)}', space=vmem, size = 0x9000, scoped, tag = 'internal scratch']
  %s0 = inlined_call_operand.vmem [shape: f32[8,5], index: 0, kind: input, shape index: {}]
  %s1 = inlined_call_operand.hbm [shape: bf16[128,896], index: 1, kind: input, shape index: {}]
  %s2 = inlined_call_operand.hbm [shape: bf16[128,384], index: 2, kind: input, shape index: {}]
  %s3 = inlined_call_operand.vmem [shape: f32[1,2688], index: 3, kind: input, shape index: {}]
  %s4 = inlined_call_operand.vmem [shape: f32[8,128], index: 4, kind: output, shape index: {}]
  %s5 = sld [smem:[#allocation0]]
  $region34: #{decoupled_flow_matching.1} parent=0
    _
  %s7 = ssub.s32 1, %s5
  %s8 = scalar_select 0, %s7, %s5
  $region1: #{decoupled_flow_matching.1} parent=0
    #allocation2 [shape = 'u8[229376]{0}', space=vmem, size = 0x38000, scoped, tag = 'input window, operand 1, single buffered']
    #allocation3 [shape = 's32[1]{0}', space=sflag, size = 0x4, scoped, tag = 'scoped memory for decoupled_flow_matching.1']
    #allocation4 [shape = 'u8[98304]{0}', space=vmem, size = 0x18000, scoped, tag = 'input window, operand 2, single buffered']
    #allocation5 [shape = 's32[1]{0}', space=sflag, size = 0x4, scoped, tag = 'scoped memory for decoupled_flow_matching.1']
    %9 = vsyncpa [#allocation3], 0
    %10 = vsyncpa [#allocation5], 0
    // Predicated region
    $region2: #{decoupled_flow_matching.1} parent=1 // pred_check
      _
    $region3: #{decoupled_flow_matching.1} parent=1 // pred_check_branch
      %12 = sbr.rel (0) target = $region5
    $region4: #{decoupled_flow_matching.1} parent=1 // pred_region
      _
    $region5: #{decoupled_flow_matching.1} parent=1 // pred_fallthru
      _
    // Predicated region
    $region6: #{decoupled_flow_matching.1} parent=1 // pred_check
      _
    $region7: #{decoupled_flow_matching.1} parent=1 // pred_check_branch
      %14 = sbr.rel (0) target = $region9
    $region8: #{decoupled_flow_matching.1} parent=1 // pred_region
      %16 = vsyncadd [#allocation3], 0
      %s17 = sshll.u32 %s1, 4
      %s18 = int_to_ptr.hbm [resolvable:$true] %s17
      %s19 = sshll.u32 [#allocation2], 4
      %s20 = int_to_ptr.vmem [resolvable:$true] %s19
      %25 = dma.hbm_to_vmem [thread:$0]  %s18, 7168, %s20, [#allocation3], 448, 448, 28
    $region9: #{decoupled_flow_matching.1} parent=1 // pred_fallthru
      _
    // Predicated region
    $region10: #{decoupled_flow_matching.1} parent=1 // pred_check
      _
    $region11: #{decoupled_flow_matching.1} parent=1 // pred_check_branch
      %27 = sbr.rel (0) target = $region13
    $region12: #{decoupled_flow_matching.1} parent=1 // pred_region
      %29 = vsyncadd [#allocation5], 0
      %s30 = sshll.u32 %s2, 4
      %s31 = int_to_ptr.hbm [resolvable:$true] %s30
      %s32 = sshll.u32 [#allocation4], 4
      %s33 = int_to_ptr.vmem [resolvable:$true] %s32
      %38 = dma.hbm_to_vmem [thread:$0]  %s31, 3072, %s33, [#allocation5], 192, 192, 12
    $region13: #{decoupled_flow_matching.1} parent=1 // pred_fallthru
      _
    // Predicated region
    $region14: #{decoupled_flow_matching.1} parent=1 // pred_check
      _
    $region15: #{decoupled_flow_matching.1} parent=1 // pred_check_branch
      %40 = sbr.rel (0) target = $region17
    $region16: #{decoupled_flow_matching.1} parent=1 // pred_region
      _
    $region17: #{decoupled_flow_matching.1} parent=1 // pred_fallthru
      _
    // Predicated region
    $region18: #{decoupled_flow_matching.1} parent=1 // pred_check
      _
    $region19: #{decoupled_flow_matching.1} parent=1 // pred_check_branch
      %42 = sbr.rel (0) target = $region21
    $region20: #{decoupled_flow_matching.1} parent=1 // pred_region
      %44 = dma.done [#allocation3], 7168
    $region21: #{decoupled_flow_matching.1} parent=1 // pred_fallthru
      _
    // Predicated region
    $region22: #{decoupled_flow_matching.1} parent=1 // pred_check
      _
    $region23: #{decoupled_flow_matching.1} parent=1 // pred_check_branch
      %46 = sbr.rel (0) target = $region25
    $region24: #{decoupled_flow_matching.1} parent=1 // pred_region
      %48 = dma.done [#allocation5], 3072
    $region25: #{decoupled_flow_matching.1} parent=1 // pred_fallthru
      _
    %v49 = vld [vmem:[%s0] sm:$0xff]
    %51 = vset.pattern.permute.xlu0 4
    %52 = vperm.xlu0 %51, %v49
    %v53 = vpop.permute.xlu0 %52
    %v55 = vmul.f32 %v53, %v49
    %v56 = vsub.f32 1.0, %v49
    %58 = vset.pattern.permute.xlu0 4
    %59 = vperm.xlu0 %58, %v56
    %v60 = vpop.permute.xlu0 %59
    %v62 = vmul.f32 %v60, %v49
    %64 = vrot.lane.b32.xlu0 %v62, 126
    %v65 = vpop.permute.xlu0 %64
    %v67 = vadd.f32 %v55, %v65
    %v68 = vld [vmem:[%s3] sm:$0x1]
    %v69 = vld [vmem:[%s3 + $0x1] sm:$0x1]
    %v70 = vld [vmem:[%s3 + $0x2] sm:$0x1]
    %v71 = vld [vmem:[%s3 + $0x3] sm:$0x3f]
    %v72 = vld [vmem:[%s3 + $0x9] sm:$0x1]
    %v73 = vld [vmem:[%s3 + $0xa] sm:$0x1]
    %v74 = vld [vmem:[%s3 + $0xb] sm:$0x1]
    %v75 = vld [vmem:[%s3 + $0xc] sm:$0x1]
    %v76 = vld [vmem:[%s3 + $0xd] sm:$0x1]
    %v77 = vld [vmem:[%s3 + $0xe] sm:$0x1]
    %v78 = vld [vmem:[%s3 + $0xf] sm:$0x1]
    %v79 = vld [vmem:[%s3 + $0x10] sm:$0x1]
    %v80 = vld [vmem:[%s3 + $0x11] sm:$0x1]
    %v81 = vld [vmem:[%s3 + $0x12] sm:$0x1]
    %v82 = vld [vmem:[%s3 + $0x13] sm:$0x1]
    %v83 = vld [vmem:[%s3 + $0x14] sm:$0x1]
    %v85 = vperm.slane %v68, 0
    %v87 = vmul.f32 %v53, %v85
    %v89 = vperm.slane %v69, 0
    %v91 = vadd.f32 %v87, %v89
    %v92 = vxor.u32 %v91, 2147483648
    %v93 = vmul.f32 %v92, 1.442695
    %v94 = vpow.pop %v93
    %v95 = vadd.f32 %v94, 1.0
    %v96 = vrcp.pop %v95
    %v97 = vmul.f32 %v95, %v96
    %v98 = vsub.f32 1.0, %v97
    %v99 = vmul.f32 %v96, %v98
    %v100 = vadd.f32 %v96, %v99
    %vm101 = vweird.f32 %v95
    %vm102 = vweird.f32 %v96
    %vm103 = vmor %vm101, %vm102
    %v104 = vsel %vm103, %v96, %v100
    %v105 = vand.u32 2147483647, %v95
    %vm106 = vcmp.eq.f32.partialorder %v105, 8.507059e+37
    %v107 = vand.u32 %v95, 2147483648
    %v108 = vor.u32 1.1754944e-38, %v107
    %v109 = vsel %vm106, %v108, %v104
    %v110 = vmul.f32 1.0, %v109
    %v111 = vmul.f32 %v91, %v110
    %v112 = vpack.c.bf16 %v111, %v111
    %v113 = vld [vmem:[#allocation2] sm:$0xf]
    %v114 = vld [vmem:[#allocation2 + $0x1c] sm:$0xf]
    %v115 = vld [vmem:[#allocation2 + $0x38] sm:$0xf]
    %v116 = vld [vmem:[#allocation2 + $0x54] sm:$0xf]
    %v117 = vld [vmem:[#allocation2 + $0x70] sm:$0xf]
    %v118 = vld [vmem:[#allocation2 + $0x8c] sm:$0xf]
    %v119 = vld [vmem:[#allocation2 + $0xa8] sm:$0xf]
    %v120 = vld [vmem:[#allocation2 + $0xc4] sm:$0xf]
    %v121 = vld [vmem:[#allocation2 + $0xe0] sm:$0xf]
    %v122 = vld [vmem:[#allocation2 + $0xfc] sm:$0xf]
    %v123 = vld [vmem:[#allocation2 + $0x118] sm:$0xf]
    %v124 = vld [vmem:[#allocation2 + $0x134] sm:$0xf]
    %v125 = vld [vmem:[#allocation2 + $0x150] sm:$0xf]
    %v126 = vld [vmem:[#allocation2 + $0x16c] sm:$0xf]
    %v127 = vld [vmem:[#allocation2 + $0x188] sm:$0xf]
    %v128 = vld [vmem:[#allocation2 + $0x1a4] sm:$0xf]
    %v130 = vperm.slane %v70, 0
    %v148 = vunpack.c.l.b16 %v113
    %v149 = vunpack.c.l.b16 %v114
    %v150 = vunpack.c.l.b16 %v115
    %v151 = vunpack.c.l.b16 %v116
    %v152 = vunpack.c.l.b16 %v117
    %v153 = vunpack.c.l.b16 %v118
    %v154 = vunpack.c.l.b16 %v119
    %v155 = vunpack.c.l.b16 %v120
    %v156 = vunpack.c.l.b16 %v121
    %v157 = vunpack.c.l.b16 %v122
    %v158 = vunpack.c.l.b16 %v123
    %v159 = vunpack.c.l.b16 %v124
    %v160 = vunpack.c.l.b16 %v125
    %v161 = vunpack.c.l.b16 %v126
    %v162 = vunpack.c.l.b16 %v127
    %v163 = vunpack.c.l.b16 %v128
    %v164 = vpack.c.b16 %v149, %v148
    %v165 = vpack.c.b16 %v151, %v150
    %v166 = vpack.c.b16 %v153, %v152
    %v167 = vpack.c.b16 %v155, %v154
    %v168 = vpack.c.b16 %v157, %v156
    %v169 = vpack.c.b16 %v159, %v158
    %v170 = vpack.c.b16 %v161, %v160
    %v171 = vpack.c.b16 %v163, %v162
    %180 = vmatpush.bf16.msra.mxu0 %v171
    %181 = vmatpush.bf16.msra.mxu0 %v170
    %182 = vmatpush.bf16.msra.mxu0 %v169
    %183 = vmatpush.bf16.msra.mxu0 %v168
    %184 = vmatpush.bf16.msra.mxu0 %v167
    %185 = vmatpush.bf16.msra.mxu0 %v166
    %186 = vmatpush.bf16.msra.mxu0 %v165
    %187 = vmatpush.bf16.msra.mxu0 %v164
    %188 = vmatmul.bf16.gmra.mxu0 %v112
    %v189 = vpop.f32.mrf.mxu0
    %v190 = vadd.f32 %v130, %v189
    %v191 = vpop.f32.mrf.mxu0
    %192 = vdwg.mxu0
    %v193 = vxor.u32 %v190, 2147483648
    %v194 = vmul.f32 %v193, 1.442695
    %v195 = vpow.pop %v194
    %v196 = vadd.f32 %v195, 1.0
    %v197 = vrcp.pop %v196
    %v198 = vmul.f32 %v196, %v197
    %v199 = vsub.f32 1.0, %v198
    %v200 = vmul.f32 %v197, %v199
    %v201 = vadd.f32 %v197, %v200
    %vm202 = vweird.f32 %v196
    %vm203 = vweird.f32 %v197
    %vm204 = vmor %vm202, %vm203
    %v205 = vsel %vm204, %v197, %v201
    %v206 = vand.u32 2147483647, %v196
    %vm207 = vcmp.eq.f32.partialorder %v206, 8.507059e+37
    %v208 = vand.u32 %v196, 2147483648
    %v209 = vor.u32 1.1754944e-38, %v208
    %v210 = vsel %vm207, %v209, %v205
    %v211 = vmul.f32 1.0, %v210
    %v212 = vmul.f32 %v190, %v211
    %v213 = vpack.c.bf16 %v212, %v212
    %v214 = vld [vmem:[#allocation2 + $0x4] sm:$0xff]
    %v215 = vld [vmem:[#allocation2 + $0xc] sm:$0xff]
    %v216 = vld [vmem:[#allocation2 + $0x14] sm:$0xff]
    %v217 = vld [vmem:[#allocation2 + $0x20] sm:$0xff]
    %v218 = vld [vmem:[#allocation2 + $0x28] sm:$0xff]
    %v219 = vld [vmem:[#allocation2 + $0x30] sm:$0xff]
    %v220 = vld [vmem:[#allocation2 + $0x3c] sm:$0xff]
    %v221 = vld [vmem:[#allocation2 + $0x44] sm:$0xff]
    %v222 = vld [vmem:[#allocation2 + $0x4c] sm:$0xff]
    %v223 = vld [vmem:[#allocation2 + $0x58] sm:$0xff]
    %v224 = vld [vmem:[#allocation2 + $0x60] sm:$0xff]
    %v225 = vld [vmem:[#allocation2 + $0x68] sm:$0xff]
    %v226 = vld [vmem:[#allocation2 + $0x74] sm:$0xff]
    %v227 = vld [vmem:[#allocation2 + $0x7c] sm:$0xff]
    %v228 = vld [vmem:[#allocation2 + $0x84] sm:$0xff]
    %v229 = vld [vmem:[#allocation2 + $0x90] sm:$0xff]
    %v230 = vld [vmem:[#allocation2 + $0x98] sm:$0xff]
    %v231 = vld [vmem:[#allocation2 + $0xa0] sm:$0xff]
    %v232 = vld [vmem:[#allocation2 + $0xac] sm:$0xff]
    %v233 = vld [vmem:[#allocation2 + $0xb4] sm:$0xff]
    %v234 = vld [vmem:[#allocation2 + $0xbc] sm:$0xff]
    %v235 = vld [vmem:[#allocation2 + $0xc8] sm:$0xff]
    %v236 = vld [vmem:[#allocation2 + $0xd0] sm:$0xff]
    %v237 = vld [vmem:[#allocation2 + $0xd8] sm:$0xff]
    %v238 = vld [vmem:[#allocation2 + $0xe4] sm:$0xff]
    %v239 = vld [vmem:[#allocation2 + $0xec] sm:$0xff]
    %v240 = vld [vmem:[#allocation2 + $0xf4] sm:$0xff]
    %v241 = vld [vmem:[#allocation2 + $0x100] sm:$0xff]
    %v242 = vld [vmem:[#allocation2 + $0x108] sm:$0xff]
    %v243 = vld [vmem:[#allocation2 + $0x110] sm:$0xff]
    %v244 = vld [vmem:[#allocation2 + $0x11c] sm:$0xff]
    %v245 = vld [vmem:[#allocation2 + $0x124] sm:$0xff]
    %v246 = vld [vmem:[#allocation2 + $0x12c] sm:$0xff]
    %v247 = vld [vmem:[#allocation2 + $0x138] sm:$0xff]
    %v248 = vld [vmem:[#allocation2 + $0x140] sm:$0xff]
    %v249 = vld [vmem:[#allocation2 + $0x148] sm:$0xff]
    %v250 = vld [vmem:[#allocation2 + $0x154] sm:$0xff]
    %v251 = vld [vmem:[#allocation2 + $0x15c] sm:$0xff]
    %v252 = vld [vmem:[#allocation2 + $0x164] sm:$0xff]
    %v253 = vld [vmem:[#allocation2 + $0x170] sm:$0xff]
    %v254 = vld [vmem:[#allocation2 + $0x178] sm:$0xff]
    %v255 = vld [vmem:[#allocation2 + $0x180] sm:$0xff]
    %v256 = vld [vmem:[#allocation2 + $0x18c] sm:$0xff]
    %v257 = vld [vmem:[#allocation2 + $0x194] sm:$0xff]
    %v258 = vld [vmem:[#allocation2 + $0x19c] sm:$0xff]
    %v259 = vld [vmem:[#allocation2 + $0x1a8] sm:$0xff]
    %v260 = vld [vmem:[#allocation2 + $0x1b0] sm:$0xff]
    %v261 = vld [vmem:[#allocation2 + $0x1b8] sm:$0xff]
    %v263 = vperm.slane %v71, 0
    %v264 = vperm.slane %v71, 1
    %v265 = vperm.slane %v71, 2
    %v266 = vperm.slane %v71, 3
    %v267 = vperm.slane %v71, 4
    %v268 = vperm.slane %v71, 5
    %v323 = vunpack.c.l.b16 %v214
    %v324 = vunpack.c.h.b16 %v214
    %v325 = vunpack.c.l.b16 %v215
    %v326 = vunpack.c.h.b16 %v215
    %v327 = vunpack.c.l.b16 %v216
    %v328 = vunpack.c.h.b16 %v216
    %v329 = vunpack.c.l.b16 %v217
    %v330 = vunpack.c.h.b16 %v217
    %v331 = vunpack.c.l.b16 %v218
    %v332 = vunpack.c.h.b16 %v218
    %v333 = vunpack.c.l.b16 %v219
    %v334 = vunpack.c.h.b16 %v219
    %v335 = vunpack.c.l.b16 %v220
    %v336 = vunpack.c.h.b16 %v220
    %v337 = vunpack.c.l.b16 %v221
    %v338 = vunpack.c.h.b16 %v221
    %v339 = vunpack.c.l.b16 %v222
    %v340 = vunpack.c.h.b16 %v222
    %v341 = vunpack.c.l.b16 %v223
    %v342 = vunpack.c.h.b16 %v223
    %v343 = vunpack.c.l.b16 %v224
    %v344 = vunpack.c.h.b16 %v224
    %v345 = vunpack.c.l.b16 %v225
    %v346 = vunpack.c.h.b16 %v225
    %v347 = vunpack.c.l.b16 %v226
    %v348 = vunpack.c.h.b16 %v226
    %v349 = vunpack.c.l.b16 %v227
    %v350 = vunpack.c.h.b16 %v227
    %v351 = vunpack.c.l.b16 %v228
    %v352 = vunpack.c.h.b16 %v228
    %v353 = vunpack.c.l.b16 %v229
    %v354 = vunpack.c.h.b16 %v229
    %v355 = vunpack.c.l.b16 %v230
    %v356 = vunpack.c.h.b16 %v230
    %v357 = vunpack.c.l.b16 %v231
    %v358 = vunpack.c.h.b16 %v231
    %v359 = vunpack.c.l.b16 %v232
    %v360 = vunpack.c.h.b16 %v232
    %v361 = vunpack.c.l.b16 %v233
    %v362 = vunpack.c.h.b16 %v233
    %v363 = vunpack.c.l.b16 %v234
    %v364 = vunpack.c.h.b16 %v234
    %v365 = vunpack.c.l.b16 %v235
    %v366 = vunpack.c.h.b16 %v235
    %v367 = vunpack.c.l.b16 %v236
    %v368 = vunpack.c.h.b16 %v236
    %v369 = vunpack.c.l.b16 %v237
    %v370 = vunpack.c.h.b16 %v237
    %v371 = vunpack.c.l.b16 %v238
    %v372 = vunpack.c.h.b16 %v238
    %v373 = vunpack.c.l.b16 %v239
    %v374 = vunpack.c.h.b16 %v239
    %v375 = vunpack.c.l.b16 %v240
    %v376 = vunpack.c.h.b16 %v240
    %v377 = vunpack.c.l.b16 %v241
    %v378 = vunpack.c.h.b16 %v241
    %v379 = vunpack.c.l.b16 %v242
    %v380 = vunpack.c.h.b16 %v242
    %v381 = vunpack.c.l.b16 %v243
    %v382 = vunpack.c.h.b16 %v243
    %v383 = vunpack.c.l.b16 %v244
    %v384 = vunpack.c.h.b16 %v244
    %v385 = vunpack.c.l.b16 %v245
    %v386 = vunpack.c.h.b16 %v245
    %v387 = vunpack.c.l.b16 %v246
    %v388 = vunpack.c.h.b16 %v246
    %v389 = vunpack.c.l.b16 %v247
    %v390 = vunpack.c.h.b16 %v247
    %v391 = vunpack.c.l.b16 %v248
    %v392 = vunpack.c.h.b16 %v248
    %v393 = vunpack.c.l.b16 %v249
    %v394 = vunpack.c.h.b16 %v249
    %v395 = vunpack.c.l.b16 %v250
    %v396 = vunpack.c.h.b16 %v250
    %v397 = vunpack.c.l.b16 %v251
    %v398 = vunpack.c.h.b16 %v251
    %v399 = vunpack.c.l.b16 %v252
    %v400 = vunpack.c.h.b16 %v252
    %v401 = vunpack.c.l.b16 %v253
    %v402 = vunpack.c.h.b16 %v253
    %v403 = vunpack.c.l.b16 %v254
    %v404 = vunpack.c.h.b16 %v254
    %v405 = vunpack.c.l.b16 %v255
    %v406 = vunpack.c.h.b16 %v255
    %v407 = vunpack.c.l.b16 %v256
    %v408 = vunpack.c.h.b16 %v256
    %v409 = vunpack.c.l.b16 %v257
    %v410 = vunpack.c.h.b16 %v257
    %v411 = vunpack.c.l.b16 %v258
    %v412 = vunpack.c.h.b16 %v258
    %v413 = vunpack.c.l.b16 %v259
    %v414 = vunpack.c.h.b16 %v259
    %v415 = vunpack.c.l.b16 %v260
    %v416 = vunpack.c.h.b16 %v260
    %v417 = vunpack.c.l.b16 %v261
    %v418 = vunpack.c.h.b16 %v261
    %v419 = vpack.c.b16 %v329, %v323
    %v420 = vpack.c.b16 %v330, %v324
    %v421 = vpack.c.b16 %v331, %v325
    %v422 = vpack.c.b16 %v332, %v326
    %v423 = vpack.c.b16 %v333, %v327
    %v424 = vpack.c.b16 %v334, %v328
    %v425 = vpack.c.b16 %v341, %v335
    %v426 = vpack.c.b16 %v342, %v336
    %v427 = vpack.c.b16 %v343, %v337
    %v428 = vpack.c.b16 %v344, %v338
    %v429 = vpack.c.b16 %v345, %v339
    %v430 = vpack.c.b16 %v346, %v340
    %v431 = vpack.c.b16 %v353, %v347
    %v432 = vpack.c.b16 %v354, %v348
    %v433 = vpack.c.b16 %v355, %v349
    %v434 = vpack.c.b16 %v356, %v350
    %v435 = vpack.c.b16 %v357, %v351
    %v436 = vpack.c.b16 %v358, %v352
    %v437 = vpack.c.b16 %v365, %v359
    %v438 = vpack.c.b16 %v366, %v360
    %v439 = vpack.c.b16 %v367, %v361
    %v440 = vpack.c.b16 %v368, %v362
    %v441 = vpack.c.b16 %v369, %v363
    %v442 = vpack.c.b16 %v370, %v364
    %v443 = vpack.c.b16 %v377, %v371
    %v444 = vpack.c.b16 %v378, %v372
    %v445 = vpack.c.b16 %v379, %v373
    %v446 = vpack.c.b16 %v380, %v374
    %v447 = vpack.c.b16 %v381, %v375
    %v448 = vpack.c.b16 %v382, %v376
    %v449 = vpack.c.b16 %v389, %v383
    %v450 = vpack.c.b16 %v390, %v384
    %v451 = vpack.c.b16 %v391, %v385
    %v452 = vpack.c.b16 %v392, %v386
    %v453 = vpack.c.b16 %v393, %v387
    %v454 = vpack.c.b16 %v394, %v388
    %v455 = vpack.c.b16 %v401, %v395
    %v456 = vpack.c.b16 %v402, %v396
    %v457 = vpack.c.b16 %v403, %v397
    %v458 = vpack.c.b16 %v404, %v398
    %v459 = vpack.c.b16 %v405, %v399
    %v460 = vpack.c.b16 %v406, %v400
    %v461 = vpack.c.b16 %v413, %v407
    %v462 = vpack.c.b16 %v414, %v408
    %v463 = vpack.c.b16 %v415, %v409
    %v464 = vpack.c.b16 %v416, %v410
    %v465 = vpack.c.b16 %v417, %v411
    %v466 = vpack.c.b16 %v418, %v412
    %515 = vmatpush.bf16.msra.mxu0 %v461
    %516 = vmatpush.bf16.msra.mxu0 %v455
    %517 = vmatpush.bf16.msra.mxu0 %v449
    %518 = vmatpush.bf16.msra.mxu0 %v443
    %519 = vmatpush.bf16.msra.mxu0 %v437
    %520 = vmatpush.bf16.msra.mxu0 %v431
    %521 = vmatpush.bf16.msra.mxu0 %v425
    %522 = vmatpush.bf16.msra.mxu0 %v419
    %523 = vmatmul.bf16.gmra.mxu0 %v213
    %v524 = vpop.f32.mrf.mxu0
    %v525 = vadd.f32 %v263, %v524
    %v526 = vpop.f32.mrf.mxu0
    %527 = vdwg.mxu0
    %528 = vmatpush.bf16.msra.mxu0 %v462
    %529 = vmatpush.bf16.msra.mxu0 %v456
    %530 = vmatpush.bf16.msra.mxu0 %v450
    %531 = vmatpush.bf16.msra.mxu0 %v444
    %532 = vmatpush.bf16.msra.mxu0 %v438
    %533 = vmatpush.bf16.msra.mxu0 %v432
    %534 = vmatpush.bf16.msra.mxu0 %v426
    %535 = vmatpush.bf16.msra.mxu0 %v420
    %536 = vmatmul.bf16.gmra.mxu0 %v213
    %v537 = vpop.f32.mrf.mxu0
    %v538 = vadd.f32 %v264, %v537
    %v539 = vpop.f32.mrf.mxu0
    %540 = vdwg.mxu0
    %541 = vmatpush.bf16.msra.mxu0 %v463
    %542 = vmatpush.bf16.msra.mxu0 %v457
    %543 = vmatpush.bf16.msra.mxu0 %v451
    %544 = vmatpush.bf16.msra.mxu0 %v445
    %545 = vmatpush.bf16.msra.mxu0 %v439
    %546 = vmatpush.bf16.msra.mxu0 %v433
    %547 = vmatpush.bf16.msra.mxu0 %v427
    %548 = vmatpush.bf16.msra.mxu0 %v421
    %549 = vmatmul.bf16.gmra.mxu0 %v213
    %v550 = vpop.f32.mrf.mxu0
    %v551 = vadd.f32 %v265, %v550
    %v552 = vpop.f32.mrf.mxu0
    %553 = vdwg.mxu0
    %554 = vmatpush.bf16.msra.mxu0 %v464
    %555 = vmatpush.bf16.msra.mxu0 %v458
    %556 = vmatpush.bf16.msra.mxu0 %v452
    %557 = vmatpush.bf16.msra.mxu0 %v446
    %558 = vmatpush.bf16.msra.mxu0 %v440
    %559 = vmatpush.bf16.msra.mxu0 %v434
    %560 = vmatpush.bf16.msra.mxu0 %v428
    %561 = vmatpush.bf16.msra.mxu0 %v422
    %562 = vmatmul.bf16.gmra.mxu0 %v213
    %v563 = vpop.f32.mrf.mxu0
    %v564 = vadd.f32 %v266, %v563
    %v565 = vpop.f32.mrf.mxu0
    %566 = vdwg.mxu0
    %567 = vmatpush.bf16.msra.mxu0 %v465
    %568 = vmatpush.bf16.msra.mxu0 %v459
    %569 = vmatpush.bf16.msra.mxu0 %v453
    %570 = vmatpush.bf16.msra.mxu0 %v447
    %571 = vmatpush.bf16.msra.mxu0 %v441
    %572 = vmatpush.bf16.msra.mxu0 %v435
    %573 = vmatpush.bf16.msra.mxu0 %v429
    %574 = vmatpush.bf16.msra.mxu0 %v423
    %575 = vmatmul.bf16.gmra.mxu0 %v213
    %v576 = vpop.f32.mrf.mxu0
    %v577 = vadd.f32 %v267, %v576
    %v578 = vpop.f32.mrf.mxu0
    %579 = vdwg.mxu0
    %580 = vmatpush.bf16.msra.mxu0 %v466
    %581 = vmatpush.bf16.msra.mxu0 %v460
    %582 = vmatpush.bf16.msra.mxu0 %v454
    %583 = vmatpush.bf16.msra.mxu0 %v448
    %584 = vmatpush.bf16.msra.mxu0 %v442
    %585 = vmatpush.bf16.msra.mxu0 %v436
    %586 = vmatpush.bf16.msra.mxu0 %v430
    %587 = vmatpush.bf16.msra.mxu0 %v424
    %588 = vmatmul.bf16.gmra.mxu0 %v213
    %v589 = vpop.f32.mrf.mxu0
    %v590 = vadd.f32 %v268, %v589
    %v591 = vpop.f32.mrf.mxu0
    %592 = vdwg.mxu0
    %594 = vset.pattern.permute.xlu0 0
    %595 = vperm.xlu0 %594, %v67
    %v596 = vpop.permute.xlu0 %595
    %v599 = vperm.slane %v72, 0
    %v601 = vmul.f32 %v596, %v599
    %v603 = vperm.slane %v74, 0
    %v605 = vadd.f32 %v603, %v601
    %606 = vset.pattern.permute.xlu0 1
    %607 = vperm.xlu0 %606, %v67
    %v608 = vpop.permute.xlu0 %607
    %v611 = vperm.slane %v73, 0
    %v613 = vmul.f32 %v608, %v611
    %v614 = vadd.f32 %v605, %v613
    %615 = vadd.xlane.f32.xlu0 %v614
    %v616 = vpop.xlane.xlu0 %615
    %v617 = vrcp.pop 128.0
    %v618 = vmul.f32 128.0, %v617
    %v619 = vsub.f32 1.0, %v618
    %v620 = vmul.f32 %v617, %v619
    %v621 = vadd.f32 %v617, %v620
    %vm622 = vweird.f32 %v617
    %v623 = vsel %vm622, %v617, %v621
    %v624 = vmul.f32 %v616, %v623
    %v625 = vmul.f32 %v614, %v614
    %626 = vadd.xlane.f32.xlu0 %v625
    %v627 = vpop.xlane.xlu0 %626
    %v628 = vmul.f32 %v627, %v623
    %v629 = vmul.f32 %v624, %v624
    %v630 = vsub.f32 %v628, %v629
    %v631 = vsub.f32 %v614, %v624
    %v632 = vadd.f32 %v630, 1e-05
    %v633 = vrsqrt.pop %v632
    %v634 = vmul.f32 %v633, %v632
    %v635 = vmul.f32 %v634, %v633
    %v636 = vmul.f32 0.5, %v635
    %v637 = vsub.f32 1.5, %v636
    %v638 = vmul.f32 %v633, %v637
    %vm639 = vweird.f32 %v632
    %vm640 = vweird.f32 %v633
    %vm641 = vmor %vm639, %vm640
    %v642 = vsel %vm641, %v633, %v638
    %v643 = vmul.f32 %v631, %v642
    %v645 = vperm.slane %v77, 0
    %v647 = vmul.f32 %v643, %v645
    %v649 = vperm.slane %v78, 0
    %v651 = vadd.f32 %v647, %v649
    %v652 = vadd.f32 %v525, 1.0
    %v653 = vmul.f32 %v651, %v652
    %v654 = vadd.f32 %v653, %v538
    %v655 = vxor.u32 %v654, 2147483648
    %v656 = vmul.f32 %v655, 1.442695
    %v657 = vpow.pop %v656
    %v658 = vadd.f32 %v657, 1.0
    %v659 = vrcp.pop %v658
    %v660 = vmul.f32 %v658, %v659
    %v661 = vsub.f32 1.0, %v660
    %v662 = vmul.f32 %v659, %v661
    %v663 = vadd.f32 %v659, %v662
    %vm664 = vweird.f32 %v658
    %vm665 = vweird.f32 %v659
    %vm666 = vmor %vm664, %vm665
    %v667 = vsel %vm666, %v659, %v663
    %v668 = vand.u32 2147483647, %v658
    %vm669 = vcmp.eq.f32.partialorder %v668, 8.507059e+37
    %v670 = vand.u32 %v658, 2147483648
    %v671 = vor.u32 1.1754944e-38, %v670
    %v672 = vsel %vm669, %v671, %v667
    %v673 = vmul.f32 1.0, %v672
    %v674 = vmul.f32 %v654, %v673
    %v675 = vpack.c.bf16 %v674, %v674
    %v676 = vld [vmem:[#allocation4] sm:$0xf]
    %v677 = vld [vmem:[#allocation4 + $0xc] sm:$0xf]
    %v678 = vld [vmem:[#allocation4 + $0x18] sm:$0xf]
    %v679 = vld [vmem:[#allocation4 + $0x24] sm:$0xf]
    %v680 = vld [vmem:[#allocation4 + $0x30] sm:$0xf]
    %v681 = vld [vmem:[#allocation4 + $0x3c] sm:$0xf]
    %v682 = vld [vmem:[#allocation4 + $0x48] sm:$0xf]
    %v683 = vld [vmem:[#allocation4 + $0x54] sm:$0xf]
    %v684 = vld [vmem:[#allocation4 + $0x60] sm:$0xf]
    %v685 = vld [vmem:[#allocation4 + $0x6c] sm:$0xf]
    %v686 = vld [vmem:[#allocation4 + $0x78] sm:$0xf]
    %v687 = vld [vmem:[#allocation4 + $0x84] sm:$0xf]
    %v688 = vld [vmem:[#allocation4 + $0x90] sm:$0xf]
    %v689 = vld [vmem:[#allocation4 + $0x9c] sm:$0xf]
    %v690 = vld [vmem:[#allocation4 + $0xa8] sm:$0xf]
    %v691 = vld [vmem:[#allocation4 + $0xb4] sm:$0xf]
    %v693 = vperm.slane %v75, 0
    %v711 = vunpack.c.l.b16 %v676
    %v712 = vunpack.c.l.b16 %v677
    %v713 = vunpack.c.l.b16 %v678
    %v714 = vunpack.c.l.b16 %v679
    %v715 = vunpack.c.l.b16 %v680
    %v716 = vunpack.c.l.b16 %v681
    %v717 = vunpack.c.l.b16 %v682
    %v718 = vunpack.c.l.b16 %v683
    %v719 = vunpack.c.l.b16 %v684
    %v720 = vunpack.c.l.b16 %v685
    %v721 = vunpack.c.l.b16 %v686
    %v722 = vunpack.c.l.b16 %v687
    %v723 = vunpack.c.l.b16 %v688
    %v724 = vunpack.c.l.b16 %v689
    %v725 = vunpack.c.l.b16 %v690
    %v726 = vunpack.c.l.b16 %v691
    %v727 = vpack.c.b16 %v712, %v711
    %v728 = vpack.c.b16 %v714, %v713
    %v729 = vpack.c.b16 %v716, %v715
    %v730 = vpack.c.b16 %v718, %v717
    %v731 = vpack.c.b16 %v720, %v719
    %v732 = vpack.c.b16 %v722, %v721
    %v733 = vpack.c.b16 %v724, %v723
    %v734 = vpack.c.b16 %v726, %v725
    %743 = vmatpush.bf16.msra.mxu0 %v734
    %744 = vmatpush.bf16.msra.mxu0 %v733
    %745 = vmatpush.bf16.msra.mxu0 %v732
    %746 = vmatpush.bf16.msra.mxu0 %v731
    %747 = vmatpush.bf16.msra.mxu0 %v730
    %748 = vmatpush.bf16.msra.mxu0 %v729
    %749 = vmatpush.bf16.msra.mxu0 %v728
    %750 = vmatpush.bf16.msra.mxu0 %v727
    %751 = vmatmul.bf16.gmra.mxu0 %v675
    %v752 = vpop.f32.mrf.mxu0
    %v753 = vadd.f32 %v693, %v752
    %v754 = vpop.f32.mrf.mxu0
    %755 = vdwg.mxu0
    %756 = vadd.xlane.f32.xlu0 %v753
    %v757 = vpop.xlane.xlu0 %756
    %v758 = vmul.f32 %v757, %v623
    %v759 = vmul.f32 %v753, %v753
    %760 = vadd.xlane.f32.xlu0 %v759
    %v761 = vpop.xlane.xlu0 %760
    %v762 = vmul.f32 %v761, %v623
    %v763 = vmul.f32 %v758, %v758
    %v764 = vsub.f32 %v762, %v763
    %v765 = vsub.f32 %v753, %v758
    %v766 = vadd.f32 %v764, 1e-05
    %v767 = vrsqrt.pop %v766
    %v768 = vmul.f32 %v767, %v766
    %v769 = vmul.f32 %v768, %v767
    %v770 = vmul.f32 0.5, %v769
    %v771 = vsub.f32 1.5, %v770
    %v772 = vmul.f32 %v767, %v771
    %vm773 = vweird.f32 %v766
    %vm774 = vweird.f32 %v767
    %vm775 = vmor %vm773, %vm774
    %v776 = vsel %vm775, %v767, %v772
    %v777 = vmul.f32 %v765, %v776
    %v779 = vperm.slane %v79, 0
    %v781 = vmul.f32 %v777, %v779
    %v783 = vperm.slane %v80, 0
    %v785 = vadd.f32 %v781, %v783
    %v786 = vadd.f32 %v551, 1.0
    %v787 = vmul.f32 %v785, %v786
    %v788 = vadd.f32 %v787, %v564
    %v789 = vxor.u32 %v788, 2147483648
    %v790 = vmul.f32 %v789, 1.442695
    %v791 = vpow.pop %v790
    %v792 = vadd.f32 %v791, 1.0
    %v793 = vrcp.pop %v792
    %v794 = vmul.f32 %v792, %v793
    %v795 = vsub.f32 1.0, %v794
    %v796 = vmul.f32 %v793, %v795
    %v797 = vadd.f32 %v793, %v796
    %vm798 = vweird.f32 %v792
    %vm799 = vweird.f32 %v793
    %vm800 = vmor %vm798, %vm799
    %v801 = vsel %vm800, %v793, %v797
    %v802 = vand.u32 2147483647, %v792
    %vm803 = vcmp.eq.f32.partialorder %v802, 8.507059e+37
    %v804 = vand.u32 %v792, 2147483648
    %v805 = vor.u32 1.1754944e-38, %v804
    %v806 = vsel %vm803, %v805, %v801
    %v807 = vmul.f32 1.0, %v806
    %v808 = vmul.f32 %v788, %v807
    %v809 = vpack.c.bf16 %v808, %v808
    %v810 = vld [vmem:[#allocation4 + $0x4] sm:$0xf]
    %v811 = vld [vmem:[#allocation4 + $0x10] sm:$0xf]
    %v812 = vld [vmem:[#allocation4 + $0x1c] sm:$0xf]
    %v813 = vld [vmem:[#allocation4 + $0x28] sm:$0xf]
    %v814 = vld [vmem:[#allocation4 + $0x34] sm:$0xf]
    %v815 = vld [vmem:[#allocation4 + $0x40] sm:$0xf]
    %v816 = vld [vmem:[#allocation4 + $0x4c] sm:$0xf]
    %v817 = vld [vmem:[#allocation4 + $0x58] sm:$0xf]
    %v818 = vld [vmem:[#allocation4 + $0x64] sm:$0xf]
    %v819 = vld [vmem:[#allocation4 + $0x70] sm:$0xf]
    %v820 = vld [vmem:[#allocation4 + $0x7c] sm:$0xf]
    %v821 = vld [vmem:[#allocation4 + $0x88] sm:$0xf]
    %v822 = vld [vmem:[#allocation4 + $0x94] sm:$0xf]
    %v823 = vld [vmem:[#allocation4 + $0xa0] sm:$0xf]
    %v824 = vld [vmem:[#allocation4 + $0xac] sm:$0xf]
    %v825 = vld [vmem:[#allocation4 + $0xb8] sm:$0xf]
    %v827 = vperm.slane %v76, 0
    %v845 = vunpack.c.l.b16 %v810
    %v846 = vunpack.c.l.b16 %v811
    %v847 = vunpack.c.l.b16 %v812
    %v848 = vunpack.c.l.b16 %v813
    %v849 = vunpack.c.l.b16 %v814
    %v850 = vunpack.c.l.b16 %v815
    %v851 = vunpack.c.l.b16 %v816
    %v852 = vunpack.c.l.b16 %v817
    %v853 = vunpack.c.l.b16 %v818
    %v854 = vunpack.c.l.b16 %v819
    %v855 = vunpack.c.l.b16 %v820
    %v856 = vunpack.c.l.b16 %v821
    %v857 = vunpack.c.l.b16 %v822
    %v858 = vunpack.c.l.b16 %v823
    %v859 = vunpack.c.l.b16 %v824
    %v860 = vunpack.c.l.b16 %v825
    %v861 = vpack.c.b16 %v846, %v845
    %v862 = vpack.c.b16 %v848, %v847
    %v863 = vpack.c.b16 %v850, %v849
    %v864 = vpack.c.b16 %v852, %v851
    %v865 = vpack.c.b16 %v854, %v853
    %v866 = vpack.c.b16 %v856, %v855
    %v867 = vpack.c.b16 %v858, %v857
    %v868 = vpack.c.b16 %v860, %v859
    %877 = vmatpush.bf16.msra.mxu0 %v868
    %878 = vmatpush.bf16.msra.mxu0 %v867
    %879 = vmatpush.bf16.msra.mxu0 %v866
    %880 = vmatpush.bf16.msra.mxu0 %v865
    %881 = vmatpush.bf16.msra.mxu0 %v864
    %882 = vmatpush.bf16.msra.mxu0 %v863
    %883 = vmatpush.bf16.msra.mxu0 %v862
    %884 = vmatpush.bf16.msra.mxu0 %v861
    %885 = vmatmul.bf16.gmra.mxu0 %v809
    %v886 = vpop.f32.mrf.mxu0
    %v887 = vadd.f32 %v827, %v886
    %v888 = vpop.f32.mrf.mxu0
    %889 = vdwg.mxu0
    %890 = vadd.xlane.f32.xlu0 %v887
    %v891 = vpop.xlane.xlu0 %890
    %v892 = vmul.f32 %v891, %v623
    %v893 = vmul.f32 %v887, %v887
    %894 = vadd.xlane.f32.xlu0 %v893
    %v895 = vpop.xlane.xlu0 %894
    %v896 = vmul.f32 %v895, %v623
    %v897 = vmul.f32 %v892, %v892
    %v898 = vsub.f32 %v896, %v897
    %v899 = vsub.f32 %v887, %v892
    %v900 = vadd.f32 %v898, 1e-05
    %v901 = vrsqrt.pop %v900
    %v902 = vmul.f32 %v901, %v900
    %v903 = vmul.f32 %v902, %v901
    %v904 = vmul.f32 0.5, %v903
    %v905 = vsub.f32 1.5, %v904
    %v906 = vmul.f32 %v901, %v905
    %vm907 = vweird.f32 %v900
    %vm908 = vweird.f32 %v901
    %vm909 = vmor %vm907, %vm908
    %v910 = vsel %vm909, %v901, %v906
    %v911 = vmul.f32 %v899, %v910
    %v913 = vperm.slane %v81, 0
    %v915 = vmul.f32 %v911, %v913
    %v917 = vperm.slane %v82, 0
    %v919 = vadd.f32 %v915, %v917
    %v920 = vadd.f32 %v577, 1.0
    %v921 = vmul.f32 %v919, %v920
    %v922 = vadd.f32 %v921, %v590
    %v923 = vxor.u32 %v922, 2147483648
    %v924 = vmul.f32 %v923, 1.442695
    %v925 = vpow.pop %v924
    %v926 = vadd.f32 %v925, 1.0
    %v927 = vrcp.pop %v926
    %v928 = vmul.f32 %v926, %v927
    %v929 = vsub.f32 1.0, %v928
    %v930 = vmul.f32 %v927, %v929
    %v931 = vadd.f32 %v927, %v930
    %vm932 = vweird.f32 %v926
    %vm933 = vweird.f32 %v927
    %vm934 = vmor %vm932, %vm933
    %v935 = vsel %vm934, %v927, %v931
    %v936 = vand.u32 2147483647, %v926
    %vm937 = vcmp.eq.f32.partialorder %v936, 8.507059e+37
    %v938 = vand.u32 %v926, 2147483648
    %v939 = vor.u32 1.1754944e-38, %v938
    %v940 = vsel %vm937, %v939, %v935
    %v941 = vmul.f32 1.0, %v940
    %v942 = vmul.f32 %v922, %v941
    %v943 = vpack.c.bf16 %v942, %v942
    %v944 = vld [vmem:[#allocation4 + $0x8] sm:$0xf]
    %v945 = vld [vmem:[#allocation4 + $0x14] sm:$0xf]
    %v946 = vld [vmem:[#allocation4 + $0x20] sm:$0xf]
    %v947 = vld [vmem:[#allocation4 + $0x2c] sm:$0xf]
    %v948 = vld [vmem:[#allocation4 + $0x38] sm:$0xf]
    %v949 = vld [vmem:[#allocation4 + $0x44] sm:$0xf]
    %v950 = vld [vmem:[#allocation4 + $0x50] sm:$0xf]
    %v951 = vld [vmem:[#allocation4 + $0x5c] sm:$0xf]
    %v952 = vld [vmem:[#allocation4 + $0x68] sm:$0xf]
    %v953 = vld [vmem:[#allocation4 + $0x74] sm:$0xf]
    %v954 = vld [vmem:[#allocation4 + $0x80] sm:$0xf]
    %v955 = vld [vmem:[#allocation4 + $0x8c] sm:$0xf]
    %v956 = vld [vmem:[#allocation4 + $0x98] sm:$0xf]
    %v957 = vld [vmem:[#allocation4 + $0xa4] sm:$0xf]
    %v958 = vld [vmem:[#allocation4 + $0xb0] sm:$0xf]
    %v959 = vld [vmem:[#allocation4 + $0xbc] sm:$0xf]
    %v961 = vperm.slane %v83, 0
    %v979 = vunpack.c.l.b16 %v944
    %v980 = vunpack.c.l.b16 %v945
    %v981 = vunpack.c.l.b16 %v946
    %v982 = vunpack.c.l.b16 %v947
    %v983 = vunpack.c.l.b16 %v948
    %v984 = vunpack.c.l.b16 %v949
    %v985 = vunpack.c.l.b16 %v950
    %v986 = vunpack.c.l.b16 %v951
    %v987 = vunpack.c.l.b16 %v952
    %v988 = vunpack.c.l.b16 %v953
    %v989 = vunpack.c.l.b16 %v954
    %v990 = vunpack.c.l.b16 %v955
    %v991 = vunpack.c.l.b16 %v956
    %v992 = vunpack.c.l.b16 %v957
    %v993 = vunpack.c.l.b16 %v958
    %v994 = vunpack.c.l.b16 %v959
    %v995 = vpack.c.b16 %v980, %v979
    %v996 = vpack.c.b16 %v982, %v981
    %v997 = vpack.c.b16 %v984, %v983
    %v998 = vpack.c.b16 %v986, %v985
    %v999 = vpack.c.b16 %v988, %v987
    %v1000 = vpack.c.b16 %v990, %v989
    %v1001 = vpack.c.b16 %v992, %v991
    %v1002 = vpack.c.b16 %v994, %v993
    %1011 = vmatpush.bf16.msra.mxu0 %v1002
    %1012 = vmatpush.bf16.msra.mxu0 %v1001
    %1013 = vmatpush.bf16.msra.mxu0 %v1000
    %1014 = vmatpush.bf16.msra.mxu0 %v999
    %1015 = vmatpush.bf16.msra.mxu0 %v998
    %1016 = vmatpush.bf16.msra.mxu0 %v997
    %1017 = vmatpush.bf16.msra.mxu0 %v996
    %1018 = vmatpush.bf16.msra.mxu0 %v995
    %1019 = vmatmul.bf16.gmra.mxu0 %v943
    %v1020 = vpop.f32.mrf.mxu0
    %v1021 = vadd.f32 %v961, %v1020
    %v1022 = vpop.f32.mrf.mxu0
    %1023 = vdwg.mxu0
    %1024 = vst [vmem:[%s4] sm:$0xff] %v1021
    // Predicated region
    $region26: #{decoupled_flow_matching.1} parent=1 // pred_check
      _
    $region27: #{decoupled_flow_matching.1} parent=1 // pred_check_branch
      %1026 = sbr.rel (0) target = $region29
    $region28: #{decoupled_flow_matching.1} parent=1 // pred_region
      _
    $region29: #{decoupled_flow_matching.1} parent=1 // pred_fallthru
      _
    // Predicated region
    $region30: #{decoupled_flow_matching.1} parent=1 // pred_check
      _
    $region31: #{decoupled_flow_matching.1} parent=1 // pred_check_branch
      %1028 = sbr.rel (0) target = $region33
    $region32: #{decoupled_flow_matching.1} parent=1 // pred_region
      _
    $region33: #{decoupled_flow_matching.1} parent=1 // pred_fallthru
      _
    %1029 = vsyncpa [#allocation3], 1
    %1030 = vsyncpa [#allocation5], 1

</llo_original>
